<compile_context>
chip_gen: v7x
topology: tpu7x:2x2x1
jax: 0.10.0
libtpu: 0.0.40
codegen_flags: <defaults>
</compile_context>

<pallas_src>
import functools

import jax
import jax.numpy as jnp
from jax.experimental import pallas as pl
from jax.experimental.pallas import tpu as pltpu


def _round_up(x, m):
    return (x + m - 1) // m * m


def _cdiv(a, b):
    return (a + b - 1) // b


# ----------------------------------------------------------------------------
# Kernels
# ----------------------------------------------------------------------------
def _lora_kernel(x_ref, wa_ref, wb_ref, o_ref, *, alpha):
    """Collapsed-K path: one M tile per grid step, w_a / w_b resident."""
    xa = jnp.dot(x_ref[...], wa_ref[...], preferred_element_type=jnp.float32)
    # alpha on the tiny (tile_m, rank_pad) intermediate, not the full output.
    xa = (xa * alpha).astype(wb_ref.dtype)
    y = jnp.dot(xa, wb_ref[...], preferred_element_type=jnp.float32)
    o_ref[...] = y.astype(o_ref.dtype)


def _lora_kernel_ktiled(x_ref, wa_ref, wb_ref, o_ref, acc_ref, *, alpha, k_block):
    """K-tiled fallback for very large in_dim.

    w_a stays resident in VMEM (constant index_map) and is sliced in-kernel;
    xa is accumulated in an f32 scratch; the tiny second matmul and the single
    lane-dense output store happen only on the last K step.
    """
    k = pl.program_id(1)

    @pl.when(k == 0)
    def _():
        acc_ref[...] = jnp.zeros_like(acc_ref)

    ks = pl.multiple_of(k * k_block, 128)
    acc_ref[...] += jnp.dot(
        x_ref[...], wa_ref[pl.ds(ks, k_block), :],
        preferred_element_type=jnp.float32)

    @pl.when(k == pl.num_programs(1) - 1)
    def _():
        xa = (acc_ref[...] * alpha).astype(wb_ref.dtype)
        y = jnp.dot(xa, wb_ref[...], preferred_element_type=jnp.float32)
        o_ref[...] = y.astype(o_ref.dtype)


# ----------------------------------------------------------------------------
# Wrapper
# ----------------------------------------------------------------------------
def lora_forward(x, w_a, w_b, alpha, *, tile_m=512, k_block=None,
                 vmem_limit_bytes=48 * 1024 * 1024, compute_dtype=None):
    """alpha * (x @ w_a @ w_b) via a Pallas TPU kernel.

    x may have arbitrary leading dims; the last dim must equal w_a.shape[0].
    Padding / slicing is only performed when a dimension is not already
    128-lane aligned; the token axis is never padded.
    """
    in_dim, rank = w_a.shape
    rank_b, out_dim = w_b.shape
    assert rank == rank_b
    assert x.shape[-1] == in_dim

    lead_shape = x.shape[:-1]
    out_dtype = x.dtype
    x2d = x.reshape(-1, in_dim)
    m = x2d.shape[0]

    # Optional reduced-precision kernel I/O (recommended on v5e); f32 accumulate.
    if compute_dtype is not None:
        x2d = x2d.astype(compute_dtype)
        w_a = w_a.astype(compute_dtype)
        w_b = w_b.astype(compute_dtype)

    # alpha: fold statically when it is a plain Python number; a traced alpha
    # is folded into the tiny w_a instead (keeps the kernel trace-safe).
    if isinstance(alpha, (int, float)):
        alpha_s = float(alpha)
    else:
        w_a = w_a * jnp.asarray(alpha, dtype=w_a.dtype)
        alpha_s = 1.0

    x_bytes = jnp.dtype(x2d.dtype).itemsize
    w_bytes = jnp.dtype(w_a.dtype).itemsize
    o_bytes = jnp.dtype(out_dtype).itemsize
    # Native sublane granularity for the input dtype (8 f32 / 16 bf16 / 32 i8).
    sublane = {4: 8, 2: 16, 1: 32}.get(x_bytes, 8)

    in_pad128 = _round_up(in_dim, 128)
    rank_pad = _round_up(rank, 128)
    out_pad = _round_up(out_dim, 128)

    # VMEM working-set budget with headroom (v7x: 64 MiB/TC -> keep limit <=48).
    budget = max(8 << 20, int(vmem_limit_bytes) - (6 << 20))

    def _vmem_collapsed(tm):
        return (2 * tm * in_pad128 * x_bytes          # x (double-buffered)
                + 2 * in_pad128 * rank_pad * w_bytes  # w_a (resident)
                + 2 * rank_pad * out_pad * w_bytes    # w_b (resident)
                + 2 * tm * out_pad * o_bytes          # y (double-buffered)
                + 4 * tm * rank_pad)                  # f32 intermediate

    # Collapse K unless even a minimal M tile cannot fit (enormous in_dim).
    if k_block is None and _vmem_collapsed(sublane) > budget:
        k_block = 2048
    use_ktiling = k_block is not None

    if use_ktiling:
        k_block = _round_up(int(k_block), 128)
        in_pad = _round_up(in_dim, k_block)

        def _vmem(tm):
            return (2 * tm * k_block * x_bytes
                    + 2 * in_pad * rank_pad * w_bytes
                    + 2 * rank_pad * out_pad * w_bytes
                    + 2 * tm * out_pad * o_bytes
                    + 4 * tm * rank_pad)
    else:
        in_pad = in_pad128
        _vmem = _vmem_collapsed

    # ---- tile_m: sublane-aligned, >=2 M tiles for megacore, fits VMEM ------
    tile_m = max(sublane, min(int(tile_m), _round_up(m, sublane)))
    tile_m = _round_up(tile_m, sublane)
    if _cdiv(m, tile_m) < 2 and m >= 4 * sublane:
        tile_m = _round_up(_cdiv(m, 2), sublane)   # keep both v7x cores busy
    while tile_m > sublane and _vmem(tile_m) > budget:
        tile_m = max(sublane, _round_up(tile_m // 2, sublane))
    grid_m = _cdiv(m, tile_m)

    # ---- zero-pad ONLY when a dim is not already aligned (exact) -----------
    if in_pad != in_dim:
        x2d = jnp.zeros((m, in_pad), x2d.dtype).at[:, :in_dim].set(x2d)
    if in_pad != in_dim or rank_pad != rank:
        w_a = jnp.zeros((in_pad, rank_pad), w_a.dtype).at[:in_dim, :rank].set(w_a)
    if rank_pad != rank or out_pad != out_dim:
        w_b = jnp.zeros((rank_pad, out_pad), w_b.dtype).at[:rank, :out_dim].set(w_b)

    cost = pl.CostEstimate(
        flops=2 * m * rank_pad * (in_pad + out_pad),
        transcendentals=0,
        bytes_accessed=(m * in_pad * x_bytes
                        + in_pad * rank_pad * w_bytes
                        + rank_pad * out_pad * w_bytes
                        + m * out_pad * o_bytes),
    )

    if not use_ktiling:
        out = pl.pallas_call(
            functools.partial(_lora_kernel, alpha=alpha_s),
            out_shape=jax.ShapeDtypeStruct((m, out_pad), out_dtype),
            grid_spec=pltpu.PrefetchScalarGridSpec(
                num_scalar_prefetch=0,
                grid=(grid_m,),
                in_specs=[
                    # Large token slab of x per grid step.
                    pl.BlockSpec((tile_m, in_pad), lambda i: (i, 0)),
                    # w_a / w_b resident: constant index_map -> DMA'd once.
                    pl.BlockSpec((in_pad, rank_pad), lambda i: (0, 0)),
                    pl.BlockSpec((rank_pad, out_pad), lambda i: (0, 0)),
                ],
                out_specs=pl.BlockSpec((tile_m, out_pad), lambda i: (i, 0)),
            ),
            compiler_params=pltpu.CompilerParams(
                dimension_semantics=("parallel",),
                vmem_limit_bytes=int(vmem_limit_bytes),
            ),
            cost_estimate=cost,
        )(x2d, w_a, w_b)
    else:
        grid = (grid_m, in_pad // k_block)
        out = pl.pallas_call(
            functools.partial(_lora_kernel_ktiled, alpha=alpha_s, k_block=k_block),
            out_shape=jax.ShapeDtypeStruct((m, out_pad), out_dtype),
            grid_spec=pltpu.PrefetchScalarGridSpec(
                num_scalar_prefetch=0,
                grid=grid,
                in_specs=[
                    pl.BlockSpec((tile_m, k_block), lambda i, k: (i, k)),
                    # w_a resident (full block), sliced in-kernel with pl.ds.
                    pl.BlockSpec((in_pad, rank_pad), lambda i, k: (0, 0)),
                    pl.BlockSpec((rank_pad, out_pad), lambda i, k: (0, 0)),
                ],
                out_specs=pl.BlockSpec((tile_m, out_pad), lambda i, k: (i, 0)),
                scratch_shapes=[pltpu.VMEM((tile_m, rank_pad), jnp.float32)],
            ),
            compiler_params=pltpu.CompilerParams(
                dimension_semantics=("parallel", "arbitrary"),
                vmem_limit_bytes=int(vmem_limit_bytes),
            ),
            cost_estimate=cost,
        )(x2d, w_a, w_b)

    if out_pad != out_dim:
        out = out[:, :out_dim]
    return out.reshape(*lead_shape, out_dim)


def lora_reference(x, w_a, w_b, alpha):
    return alpha * (x @ w_a @ w_b)


if __name__ == "__main__":
    # Small shapes consistent with the module: batch=2, seq=8, hidden=32.
    batch, seq, in_dim, out_dim, rank, alpha = 2, 8, 32, 32, 4, 2.0

    key = jax.random.PRNGKey(0)
    kx, ka, kb = jax.random.split(key, 3)

    x = jax.random.normal(kx, (batch, seq, in_dim), dtype=jnp.float32)

    # Deterministic init mirroring LoRA.__init__:
    std_dev = 1.0 / jnp.sqrt(jnp.float32(rank))
    w_a = jax.random.normal(ka, (in_dim, rank), dtype=jnp.float32) * std_dev
    w_b = jnp.zeros((rank, out_dim), dtype=jnp.float32)  # per module __init__

    # 1) Exact module semantics (zero-init w_b -> output is exactly 0).
    y = lora_forward(x, w_a, w_b, alpha)
    jax.block_until_ready(y)
    y_ref = lora_reference(x, w_a, w_b, alpha)
    assert y.shape == y_ref.shape
    assert jnp.allclose(y, y_ref, atol=1e-5), "mismatch with zero-init w_b"

    # 2) Non-zero w_b (exercises both matmuls and lane padding).
    w_b_nz = jax.random.normal(kb, (rank, out_dim), dtype=jnp.float32) * 0.1
    y2 = lora_forward(x, w_a, w_b_nz, alpha)
    jax.block_until_ready(y2)
    y2_ref = lora_reference(x, w_a, w_b_nz, alpha)
    assert jnp.allclose(y2, y2_ref, atol=1e-4, rtol=1e-4), "kernel mismatch"

    # 3) Traced (non-Python) alpha path.
    y2b = lora_forward(x, w_a, w_b_nz, jnp.float32(alpha))
    jax.block_until_ready(y2b)
    assert jnp.allclose(y2b, y2_ref, atol=1e-4, rtol=1e-4), "traced-alpha mismatch"

    # 4) bf16 I/O, odd token count (uneven M tiles, 2 M tiles for megacore).
    xb = jax.random.normal(kx, (3, 67, in_dim), dtype=jnp.bfloat16)
    wa_b, wb_b = w_a.astype(jnp.bfloat16), w_b_nz.astype(jnp.bfloat16)
    y3 = lora_forward(xb, wa_b, wb_b, alpha)
    jax.block_until_ready(y3)
    y3_ref = lora_reference(xb.astype(jnp.float32), wa_b.astype(jnp.float32),
                            wb_b.astype(jnp.float32), alpha)
    assert jnp.allclose(y3.astype(jnp.float32), y3_ref, atol=3e-2, rtol=3e-2), \
        "bf16 kernel mismatch"

    # 5) compute_dtype path (v5e-style bf16 kernel I/O, f32 in / f32 out).
    y4 = lora_forward(x, w_a, w_b_nz, alpha, compute_dtype=jnp.bfloat16)
    jax.block_until_ready(y4)
    assert y4.dtype == x.dtype
    assert jnp.allclose(y4, y2_ref, atol=3e-2, rtol=3e-2), "compute_dtype mismatch"

    # 6) Forced K-tiled fallback path (large-in_dim code path, small shapes).
    xk = jax.random.normal(ka, (2, 24, 256), dtype=jnp.float32)
    wak = jax.random.normal(kb, (256, rank), dtype=jnp.float32) * std_dev
    wbk = jax.random.normal(kx, (rank, 64), dtype=jnp.float32) * 0.1
    y5 = lora_forward(xk, wak, wbk, alpha, k_block=128)
    jax.block_until_ready(y5)
    y5_ref = lora_reference(xk, wak, wbk, alpha)
    assert jnp.allclose(y5, y5_ref, atol=1e-4, rtol=1e-4), "k-tiled kernel mismatch"

    print("KERNEL_OK")
</pallas_src>

<mosaic_0001>
module attributes {stable_mosaic.version = 11 : i64} {
  func.func @_lora_kernel(%arg0: i32, %arg1: memref<16x128xf32, #tpu.memory_space<vmem>>, %arg2: memref<128x128xf32, #tpu.memory_space<vmem>>, %arg3: memref<128x128xf32, #tpu.memory_space<vmem>>, %arg4: memref<16x128xf32, #tpu.memory_space<vmem>>) attributes {dimension_semantics = [#tpu.dimension_semantics<parallel>], iteration_bounds = array<i64: 1>, scalar_prefetch = 0 : i64, scratch_operands = 0 : i64, tpu.core_type = #tpu.core_type<tc>, window_params = [{transform_indices = @transform_0, window_bounds = array<i64: 16, 128>}, {pipeline_mode = #tpu.pipeline_mode<synchronous>, transform_indices = @transform_1, window_bounds = array<i64: 128, 128>}, {pipeline_mode = #tpu.pipeline_mode<synchronous>, transform_indices = @transform_2, window_bounds = array<i64: 128, 128>}, {transform_indices = @transform_3, window_bounds = array<i64: 16, 128>}]} {
    %c0 = arith.constant 0 : index
    %c0_0 = arith.constant 0 : index
    %0 = vector.load %arg1[%c0, %c0_0] : memref<16x128xf32, #tpu.memory_space<vmem>>, vector<16x128xf32>
    %c0_1 = arith.constant 0 : index
    %c0_2 = arith.constant 0 : index
    %1 = vector.load %arg2[%c0_1, %c0_2] : memref<128x128xf32, #tpu.memory_space<vmem>>, vector<128x128xf32>
    %cst = arith.constant dense<0.000000e+00> : vector<16x128xf32>
    %2 = tpu.matmul %0, %1, %cst {dimension_numbers = #tpu.dot_dimension_numbers<[1], [0], [0], [1], [0, 0, 1, 1], [], []>} : vector<16x128xf32>, vector<128x128xf32>, vector<16x128xf32> -> vector<16x128xf32>
    %cst_3 = arith.constant 2.000000e+00 : f32
    %3 = vector.broadcast %cst_3 : f32 to vector<16x128xf32>
    %4 = arith.mulf %2, %3 : vector<16x128xf32>
    %c0_4 = arith.constant 0 : index
    %c0_5 = arith.constant 0 : index
    %5 = vector.load %arg3[%c0_4, %c0_5] : memref<128x128xf32, #tpu.memory_space<vmem>>, vector<128x128xf32>
    %cst_6 = arith.constant dense<0.000000e+00> : vector<16x128xf32>
    %6 = tpu.matmul %4, %5, %cst_6 {dimension_numbers = #tpu.dot_dimension_numbers<[1], [0], [0], [1], [0, 0, 1, 1], [], []>} : vector<16x128xf32>, vector<128x128xf32>, vector<16x128xf32> -> vector<16x128xf32>
    %c0_7 = arith.constant 0 : index
    %c0_8 = arith.constant 0 : index
    %7 = vector.load %arg4[%c0_7, %c0_8] : memref<16x128xf32, #tpu.memory_space<vmem>>, vector<16x128xf32>
    tpu.vector_store %arg4[%c0_7, %c0_8], %6 {strides = array<i32>} : memref<16x128xf32, #tpu.memory_space<vmem>>, vector<16x128xf32>,
    return
  }
  func.func @transform_0(%arg0: i32) -> (i32, i32) {
    %c0_i32 = arith.constant 0 : i32
    %c0_i32_0 = arith.constant 0 : i32
    return %arg0, %c0_i32 : i32, i32
  }
  func.func @transform_1(%arg0: i32) -> (i32, i32) {
    %c0_i32 = arith.constant 0 : i32
    %c0_i32_0 = arith.constant 0 : i32
    %c0_i32_1 = arith.constant 0 : i32
    return %c0_i32, %c0_i32_0 : i32, i32
  }
  func.func @transform_2(%arg0: i32) -> (i32, i32) {
    %c0_i32 = arith.constant 0 : i32
    %c0_i32_0 = arith.constant 0 : i32
    %c0_i32_1 = arith.constant 0 : i32
    return %c0_i32, %c0_i32_0 : i32, i32
  }
  func.func @transform_3(%arg0: i32) -> (i32, i32) {
    %c0_i32 = arith.constant 0 : i32
    %c0_i32_0 = arith.constant 0 : i32
    return %arg0, %c0_i32 : i32, i32
  }
}

</mosaic_0001>

<llo_original>
// kernel: tpu_custom_call.1
$region0: #{tpu_custom_call.1}
  #allocation0 [shape = 'u32[]', space=smem, size = 0x4, offset = 0x4, fixed_abs, tag = 'smem constant byte address 0x4 - core index']
  #allocation1 [shape = 'u32[144,128]{1,0:T(1,128)}', space=vmem, size = 0x12000, scoped, tag = 'internal scratch']
  %s0 = inlined_call_operand.hbm [shape: f32[16,128], index: 0, kind: input, shape index: {}]
  %s1 = inlined_call_operand.hbm [shape: f32[128,128], index: 1, kind: input, shape index: {}]
  %s2 = inlined_call_operand.hbm [shape: f32[128,128], index: 2, kind: input, shape index: {}]
  %s3 = inlined_call_operand.hbm [shape: f32[16,128], index: 3, kind: output, shape index: {}]
  %s4 = sld [smem:[#allocation0]]
  $region34: #{tpu_custom_call.1} parent=0
    _
  %s6 = ssub.s32 1, %s4
  %s7 = scalar_select 0, %s6, %s4
  $region1: #{tpu_custom_call.1} parent=0
    #allocation2 [shape = 'u8[8192]{0}', space=vmem, size = 0x2000, scoped, tag = 'input window, operand 0, single buffered']
    #allocation3 [shape = 's32[1]{0}', space=sflag, size = 0x4, scoped, tag = 'scoped memory for tpu_custom_call.1']
    #allocation4 [shape = 's32[1]{0}', space=sflag, size = 0x4, scoped, tag = 'scoped memory for tpu_custom_call.1']
    #allocation5 [shape = 'u8[65536]{0}', space=vmem, size = 0x10000, scoped, tag = 'input window, operand 1, single buffered']
    #allocation6 [shape = 's32[1]{0}', space=sflag, size = 0x4, scoped, tag = 'scoped memory for tpu_custom_call.1']
    #allocation7 [shape = 'u8[65536]{0}', space=vmem, size = 0x10000, scoped, tag = 'input window, operand 2, single buffered']
    #allocation8 [shape = 'u8[8192]{0}', space=vmem, size = 0x2000, scoped, tag = 'output window, operand 0, single buffered']
    %8 = vsyncpa [#allocation3], 0
    %9 = vsyncpa [#allocation6], 0
    %10 = vsyncpa [#allocation4], 0
    // Predicated region
    $region2: #{tpu_custom_call.1} parent=1 // pred_check
      _
    $region3: #{tpu_custom_call.1} parent=1 // pred_check_branch
      %12 = sbr.rel (0) target = $region5
    $region4: #{tpu_custom_call.1} parent=1 // pred_region
      %s14 = ssub.s32 256, 256
      %15 = vsyncadd [#allocation3], %s14
      %s16 = sshll.u32 [#allocation2], 4
      %s17 = int_to_ptr.vmem [resolvable:$true] %s16
      %22 = dma.hbm_to_vmem [thread:$0]  %s0, 256, %s17, [#allocation3], 128, 128, 8
    $region5: #{tpu_custom_call.1} parent=1 // pred_fallthru
      _
    // Predicated region
    $region6: #{tpu_custom_call.1} parent=1 // pred_check
      _
    $region7: #{tpu_custom_call.1} parent=1 // pred_check_branch
      %24 = sbr.rel (0) target = $region9
    $region8: #{tpu_custom_call.1} parent=1 // pred_region
      %s26 = ssub.s32 2048, 2048
      %27 = vsyncadd [#allocation6], %s26
      %s28 = sshll.u32 [#allocation5], 4
      %s29 = int_to_ptr.vmem [resolvable:$true] %s28
      %34 = dma.hbm_to_vmem [thread:$0]  %s1, 2048, %s29, [#allocation6], 128, 128, 8
    $region9: #{tpu_custom_call.1} parent=1 // pred_fallthru
      _
    // Predicated region
    $region10: #{tpu_custom_call.1} parent=1 // pred_check
      _
    $region11: #{tpu_custom_call.1} parent=1 // pred_check_branch
      %36 = sbr.rel (0) target = $region13
    $region12: #{tpu_custom_call.1} parent=1 // pred_region
      %s38 = ssub.s32 2048, 2048
      %39 = vsyncadd [#allocation6], %s38
      %s40 = sshll.u32 [#allocation7], 4
      %s41 = int_to_ptr.vmem [resolvable:$true] %s40
      %46 = dma.hbm_to_vmem [thread:$0]  %s2, 2048, %s41, [#allocation6], 128, 128, 8
    $region13: #{tpu_custom_call.1} parent=1 // pred_fallthru
      _
    // Predicated region
    $region14: #{tpu_custom_call.1} parent=1 // pred_check
      _
    $region15: #{tpu_custom_call.1} parent=1 // pred_check_branch
      %48 = sbr.rel (0) target = $region17
    $region16: #{tpu_custom_call.1} parent=1 // pred_region
      %49 = dma.done [#allocation3], 256
    $region17: #{tpu_custom_call.1} parent=1 // pred_fallthru
      _
    // Predicated region
    $region18: #{tpu_custom_call.1} parent=1 // pred_check
      _
    $region19: #{tpu_custom_call.1} parent=1 // pred_check_branch
      %51 = sbr.rel (0) target = $region21
    $region20: #{tpu_custom_call.1} parent=1 // pred_region
      %52 = dma.done [#allocation6], 2048
    $region21: #{tpu_custom_call.1} parent=1 // pred_fallthru
      _
    // Predicated region
    $region22: #{tpu_custom_call.1} parent=1 // pred_check
      _
    $region23: #{tpu_custom_call.1} parent=1 // pred_check_branch
      %54 = sbr.rel (0) target = $region25
    $region24: #{tpu_custom_call.1} parent=1 // pred_region
      %55 = dma.done [#allocation6], 2048
    $region25: #{tpu_custom_call.1} parent=1 // pred_fallthru
      _
    %v56 = vld [vmem:[#allocation2] sm:$0xff]
    %v57 = vld [vmem:[#allocation2 + $0x8] sm:$0xff]
    %v58 = vld [vmem:[#allocation5] sm:$0xff]
    %v59 = vld [vmem:[#allocation5 + $0x8] sm:$0xff]
    %v60 = vld [vmem:[#allocation5 + $0x10] sm:$0xff]
    %v61 = vld [vmem:[#allocation5 + $0x18] sm:$0xff]
    %v62 = vld [vmem:[#allocation5 + $0x20] sm:$0xff]
    %v63 = vld [vmem:[#allocation5 + $0x28] sm:$0xff]
    %v64 = vld [vmem:[#allocation5 + $0x30] sm:$0xff]
    %v65 = vld [vmem:[#allocation5 + $0x38] sm:$0xff]
    %v66 = vld [vmem:[#allocation5 + $0x40] sm:$0xff]
    %v67 = vld [vmem:[#allocation5 + $0x48] sm:$0xff]
    %v68 = vld [vmem:[#allocation5 + $0x50] sm:$0xff]
    %v69 = vld [vmem:[#allocation5 + $0x58] sm:$0xff]
    %v70 = vld [vmem:[#allocation5 + $0x60] sm:$0xff]
    %v71 = vld [vmem:[#allocation5 + $0x68] sm:$0xff]
    %v72 = vld [vmem:[#allocation5 + $0x70] sm:$0xff]
    %v73 = vld [vmem:[#allocation5 + $0x78] sm:$0xff]
    %74 = vmatprep.subr.mxu0 0.0
    %75 = vmatpush1.msra.mxu0 %v58
    %76 = vmatprep.subr.mxu0 0.0
    %77 = vmatpush1.msra.mxu0 %v59
    %78 = vmatprep.subr.mxu0 0.0
    %79 = vmatpush1.msra.mxu0 %v60
    %80 = vmatprep.subr.mxu0 0.0
    %81 = vmatpush1.msra.mxu0 %v61
    %82 = vmatprep.subr.mxu0 0.0
    %83 = vmatpush1.msra.mxu0 %v62
    %84 = vmatprep.subr.mxu0 0.0
    %85 = vmatpush1.msra.mxu0 %v63
    %86 = vmatprep.subr.mxu0 0.0
    %87 = vmatpush1.msra.mxu0 %v64
    %88 = vmatprep.subr.mxu0 0.0
    %89 = vmatpush1.msra.mxu0 %v65
    %90 = vmatprep.subr.mxu0 0.0
    %91 = vmatpush1.msra.mxu0 %v66
    %92 = vmatprep.subr.mxu0 0.0
    %93 = vmatpush1.msra.mxu0 %v67
    %94 = vmatprep.subr.mxu0 0.0
    %95 = vmatpush1.msra.mxu0 %v68
    %96 = vmatprep.subr.mxu0 0.0
    %97 = vmatpush1.msra.mxu0 %v69
    %98 = vmatprep.subr.mxu0 0.0
    %99 = vmatpush1.msra.mxu0 %v70
    %100 = vmatprep.subr.mxu0 0.0
    %101 = vmatpush1.msra.mxu0 %v71
    %102 = vmatprep.subr.mxu0 0.0
    %103 = vmatpush1.msra.mxu0 %v72
    %104 = vmatprep.subr.mxu0 0.0
    %105 = vmatpush1.msra.mxu0 %v73
    %106 = vmatprep.subr.mxu0 0.0
    %107 = vmatpush1.msra.mxu0 0.0
    %108 = vmatprep.subr.mxu0 0.0
    %109 = vmatpush1.msra.mxu0 0.0
    %110 = vmatprep.subr.mxu0 0.0
    %111 = vmatpush1.msra.mxu0 0.0
    %112 = vmatprep.subr.mxu0 0.0
    %113 = vmatpush1.msra.mxu0 0.0
    %114 = vmatprep.subr.mxu0 0.0
    %115 = vmatpush1.msra.mxu0 0.0
    %116 = vmatprep.subr.mxu0 0.0
    %117 = vmatpush1.msra.mxu0 0.0
    %118 = vmatprep.subr.mxu0 0.0
    %119 = vmatpush1.msra.mxu0 0.0
    %120 = vmatprep.subr.mxu0 0.0
    %121 = vmatpush1.msra.mxu0 0.0
    %122 = vmatprep.subr.mxu0 0.0
    %123 = vmatpush1.msra.mxu0 0.0
    %124 = vmatprep.subr.mxu0 0.0
    %125 = vmatpush1.msra.mxu0 0.0
    %126 = vmatprep.subr.mxu0 0.0
    %127 = vmatpush1.msra.mxu0 0.0
    %128 = vmatprep.subr.mxu0 0.0
    %129 = vmatpush1.msra.mxu0 0.0
    %130 = vmatprep.subr.mxu0 0.0
    %131 = vmatpush1.msra.mxu0 0.0
    %132 = vmatprep.subr.mxu0 0.0
    %133 = vmatpush1.msra.mxu0 0.0
    %134 = vmatprep.subr.mxu0 0.0
    %135 = vmatpush1.msra.mxu0 0.0
    %136 = vmatprep.subr.mxu0 0.0
    %137 = vmatpush1.msra.mxu0 0.0
    %138 = vmatprep.mubr.f32.mxu0 0.0
    %139 = vmatmul.mubr.f32.gmra.mrb[0].mxu0 %v56
    %v140 = vpop.f32.mrb[0].mxu0
    %v141 = vadd.f32 0.0, %v140
    %v142 = vpop.f32.mrb[0].mxu0
    %143 = vmatprep.mubr.f32.mxu0 0.0
    %144 = vmatmul.mubr.f32.gmra.mrb[0].mxu0 %v57
    %v145 = vpop.f32.mrb[0].mxu0
    %v146 = vadd.f32 0.0, %v145
    %v147 = vpop.f32.mrb[0].mxu0
    %148 = vdwg.mxu0
    %v149 = vmul.f32 %v141, 2.0
    %v150 = vmul.f32 %v146, 2.0
    %v151 = vld [vmem:[#allocation7] sm:$0xff]
    %v152 = vld [vmem:[#allocation7 + $0x8] sm:$0xff]
    %v153 = vld [vmem:[#allocation7 + $0x10] sm:$0xff]
    %v154 = vld [vmem:[#allocation7 + $0x18] sm:$0xff]
    %v155 = vld [vmem:[#allocation7 + $0x20] sm:$0xff]
    %v156 = vld [vmem:[#allocation7 + $0x28] sm:$0xff]
    %v157 = vld [vmem:[#allocation7 + $0x30] sm:$0xff]
    %v158 = vld [vmem:[#allocation7 + $0x38] sm:$0xff]
    %v159 = vld [vmem:[#allocation7 + $0x40] sm:$0xff]
    %v160 = vld [vmem:[#allocation7 + $0x48] sm:$0xff]
    %v161 = vld [vmem:[#allocation7 + $0x50] sm:$0xff]
    %v162 = vld [vmem:[#allocation7 + $0x58] sm:$0xff]
    %v163 = vld [vmem:[#allocation7 + $0x60] sm:$0xff]
    %v164 = vld [vmem:[#allocation7 + $0x68] sm:$0xff]
    %v165 = vld [vmem:[#allocation7 + $0x70] sm:$0xff]
    %v166 = vld [vmem:[#allocation7 + $0x78] sm:$0xff]
    %167 = vmatprep.subr.mxu0 0.0
    %168 = vmatpush1.msra.mxu0 %v151
    %169 = vmatprep.subr.mxu0 0.0
    %170 = vmatpush1.msra.mxu0 %v152
    %171 = vmatprep.subr.mxu0 0.0
    %172 = vmatpush1.msra.mxu0 %v153
    %173 = vmatprep.subr.mxu0 0.0
    %174 = vmatpush1.msra.mxu0 %v154
    %175 = vmatprep.subr.mxu0 0.0
    %176 = vmatpush1.msra.mxu0 %v155
    %177 = vmatprep.subr.mxu0 0.0
    %178 = vmatpush1.msra.mxu0 %v156
    %179 = vmatprep.subr.mxu0 0.0
    %180 = vmatpush1.msra.mxu0 %v157
    %181 = vmatprep.subr.mxu0 0.0
    %182 = vmatpush1.msra.mxu0 %v158
    %183 = vmatprep.subr.mxu0 0.0
    %184 = vmatpush1.msra.mxu0 %v159
    %185 = vmatprep.subr.mxu0 0.0
    %186 = vmatpush1.msra.mxu0 %v160
    %187 = vmatprep.subr.mxu0 0.0
    %188 = vmatpush1.msra.mxu0 %v161
    %189 = vmatprep.subr.mxu0 0.0
    %190 = vmatpush1.msra.mxu0 %v162
    %191 = vmatprep.subr.mxu0 0.0
    %192 = vmatpush1.msra.mxu0 %v163
    %193 = vmatprep.subr.mxu0 0.0
    %194 = vmatpush1.msra.mxu0 %v164
    %195 = vmatprep.subr.mxu0 0.0
    %196 = vmatpush1.msra.mxu0 %v165
    %197 = vmatprep.subr.mxu0 0.0
    %198 = vmatpush1.msra.mxu0 %v166
    %199 = vmatprep.subr.mxu0 0.0
    %200 = vmatpush1.msra.mxu0 0.0
    %201 = vmatprep.subr.mxu0 0.0
    %202 = vmatpush1.msra.mxu0 0.0
    %203 = vmatprep.subr.mxu0 0.0
    %204 = vmatpush1.msra.mxu0 0.0
    %205 = vmatprep.subr.mxu0 0.0
    %206 = vmatpush1.msra.mxu0 0.0
    %207 = vmatprep.subr.mxu0 0.0
    %208 = vmatpush1.msra.mxu0 0.0
    %209 = vmatprep.subr.mxu0 0.0
    %210 = vmatpush1.msra.mxu0 0.0
    %211 = vmatprep.subr.mxu0 0.0
    %212 = vmatpush1.msra.mxu0 0.0
    %213 = vmatprep.subr.mxu0 0.0
    %214 = vmatpush1.msra.mxu0 0.0
    %215 = vmatprep.subr.mxu0 0.0
    %216 = vmatpush1.msra.mxu0 0.0
    %217 = vmatprep.subr.mxu0 0.0
    %218 = vmatpush1.msra.mxu0 0.0
    %219 = vmatprep.subr.mxu0 0.0
    %220 = vmatpush1.msra.mxu0 0.0
    %221 = vmatprep.subr.mxu0 0.0
    %222 = vmatpush1.msra.mxu0 0.0
    %223 = vmatprep.subr.mxu0 0.0
    %224 = vmatpush1.msra.mxu0 0.0
    %225 = vmatprep.subr.mxu0 0.0
    %226 = vmatpush1.msra.mxu0 0.0
    %227 = vmatprep.subr.mxu0 0.0
    %228 = vmatpush1.msra.mxu0 0.0
    %229 = vmatprep.subr.mxu0 0.0
    %230 = vmatpush1.msra.mxu0 0.0
    %231 = vmatprep.mubr.f32.mxu0 0.0
    %232 = vmatmul.mubr.f32.gmra.mrb[0].mxu0 %v149
    %v233 = vpop.f32.mrb[0].mxu0
    %v234 = vadd.f32 0.0, %v233
    %v235 = vpop.f32.mrb[0].mxu0
    %236 = vmatprep.mubr.f32.mxu0 0.0
    %237 = vmatmul.mubr.f32.gmra.mrb[0].mxu0 %v150
    %v238 = vpop.f32.mrb[0].mxu0
    %v239 = vadd.f32 0.0, %v238
    %v240 = vpop.f32.mrb[0].mxu0
    %241 = vdwg.mxu0
    %242 = vst [vmem:[#allocation8] sm:$0xff] %v234
    %243 = vst [vmem:[#allocation8 + $0x8] sm:$0xff] %v239
    // Predicated region
    $region26: #{tpu_custom_call.1} parent=1 // pred_check
      _
    $region27: #{tpu_custom_call.1} parent=1 // pred_check_branch
      %245 = sbr.rel (0) target = $region29
    $region28: #{tpu_custom_call.1} parent=1 // pred_region
      %s247 = ssub.s32 256, 256
      %248 = vsyncadd [#allocation4], %s247
      %s249 = sshll.u32 [#allocation8], 4
      %s250 = int_to_ptr.vmem [resolvable:$true] %s249
      %255 = dma.vmem_to_hbm [thread:$0]  %s250, 256, %s3, [#allocation4], 128, 128, 8
    $region29: #{tpu_custom_call.1} parent=1 // pred_fallthru
      _
    // Predicated region
    $region30: #{tpu_custom_call.1} parent=1 // pred_check
      _
    $region31: #{tpu_custom_call.1} parent=1 // pred_check_branch
      %257 = sbr.rel (0) target = $region33
    $region32: #{tpu_custom_call.1} parent=1 // pred_region
      %258 = dma.done [#allocation4], 256
    $region33: #{tpu_custom_call.1} parent=1 // pred_fallthru
      _
    %259 = vsyncpa [#allocation3], 1
    %260 = vsyncpa [#allocation6], 1
    %261 = vsyncpa [#allocation4], 1

</llo_original>
